<compile_context>
chip_gen: v5e
topology: v5e:2x2
jax: 0.10.0
libtpu: 0.0.40
codegen_flags: <defaults>
</compile_context>

<pallas_src>
import functools

import jax
import jax.numpy as jnp
import numpy as np
from jax.experimental import pallas as pl
from jax.experimental.pallas import tpu as pltpu


# ----------------------- fixed "parameters" (from __init__) ------------------
def _gauss_1d(kernel_size, sigma):
    """1-D factor of the normalized 2-D gaussian used by gaussian_kernel()."""
    ax = np.arange(kernel_size, dtype=np.float64) - (kernel_size - 1) / 2.0
    g = np.exp(-(ax ** 2) / (2.0 * sigma ** 2))
    return (g / g.sum()).astype(np.float32)


def _gauss_2d(kernel_size, sigma):
    g = _gauss_1d(kernel_size, sigma)
    return np.outer(g, g).astype(np.float32)   # == normalized 2-D gaussian


# --------------------------------- kernel ------------------------------------
def _spa_refl_kernel(enh_ref, org_ref, out_ref, *, weight, k1d):
    """One batch-block: (Bt, H, W) native dtype in, (Bt, H-K-1, W-K-1) f32 out."""
    x = enh_ref[...].astype(jnp.float32)   # widen in-VMEM (VPU), DMA stayed narrow
    y = org_ref[...].astype(jnp.float32)
    d = y - x                              # linearity: gauss(org) - gauss(enh) == gauss(d)
    _, H, W = d.shape                      # static
    K = len(k1d)
    Hp, Wp = H - K + 1, W - K + 1

    # Separable depthwise gaussian, VALID padding.
    acc = np.float32(k1d[0]) * d[:, 0:Hp, :]                 # taps along H (sublanes)
    for i in range(1, K):
        acc = acc + np.float32(k1d[i]) * d[:, i:i + Hp, :]
    pooled = np.float32(k1d[0]) * acc[:, :, 0:Wp]            # taps along W (lanes)
    for j in range(1, K):
        pooled = pooled + np.float32(k1d[j]) * acc[:, :, j:j + Wp]

    Ho, Wo = Hp - 2, Wp - 2
    # Fused directional 3x3 diffs: D_left/D_right share one horizontal first-difference,
    # D_up/D_down share one vertical first-difference (exact, just fewer temporaries).
    dh = pooled[:, 1:1 + Ho, 1:] - pooled[:, 1:1 + Ho, :-1]   # (Bt, Ho, Wp-1)
    dv = pooled[:, 1:, 1:1 + Wo] - pooled[:, :-1, 1:1 + Wo]   # (Bt, Hp-1, Wo)
    dh2 = dh * dh
    dv2 = dv * dv
    E = (dh2[:, :, 0:Wo] + dh2[:, :, 1:1 + Wo]
         + dv2[:, 0:Ho, :] + dv2[:, 1:1 + Ho, :])

    # TODO(synk): the module's host-side `print(torch.mean(E))` debug print is skipped;
    # it does not affect the returned value.
    out_ref[...] = (np.float32(weight) * E).astype(out_ref.dtype)


# -------------------------------- wrapper ------------------------------------
def _vmem_capacity_bytes():
    """Physical VMEM of the current TPU generation; conservative fallback (v7x)."""
    try:
        cap = getattr(pltpu.get_tpu_info(), "vmem_capacity_bytes", None)
        if cap:
            return int(cap)
    except Exception:
        pass
    return 64 << 20


def _pick_block_b(B, per_image_bytes, budget_bytes):
    """Largest divisor of B whose per-step working set fits the budget and, when
    possible, keeps >= 2 grid steps so v7x megacore can split the batch axis."""
    max_b = max(1, budget_bytes // per_image_bytes)
    best = 1
    for cand in range(1, B + 1):
        if B % cand == 0 and cand <= max_b and (B // cand >= 2 or B <= 1):
            best = cand
    return best


def l_spa_refl(enhance, org, loss_weight=1.0, spa_kernel=5):
    """enhance, org: (N, C, H, W) NCHW, any float dtype. Returns (N, C, H-K-1, W-K-1) f32."""
    N, C, H, W = org.shape
    K = int(spa_kernel)
    Ho = H - K - 1
    Wo = W - K - 1
    assert Ho > 0 and Wo > 0, "image too small for gaussian + 3x3 VALID convs"

    k1d = tuple(float(v) for v in _gauss_1d(K, K / 4.0))

    # Depthwise conv with the same kernel per channel -> channels are just more images.
    # Keep the native dtype on the wire; the kernel widens in-VMEM.
    B = N * C
    xb = enhance.reshape(B, H, W)
    yb = org.reshape(B, H, W)
    in_bytes = jnp.dtype(org.dtype).itemsize

    # Per-generation VMEM budget: raise the scoped limit explicitly (v5e default is
    # only 16 MiB, v6e 32 MiB) but leave headroom below physical VMEM (v7x = 64 MiB).
    vmem_cap = _vmem_capacity_bytes()
    vmem_limit = min(int(vmem_cap * 3 // 4), 112 << 20)

    # Per-image VMEM estimate per grid step: 2 inputs x 2 pipeline buffers (native dtype)
    # + 2 output buffers (f32) + ~8 block-sized f32 elementwise temporaries.
    per_image = H * W * (4 * in_bytes + 8 * 4) + Ho * Wo * (2 * 4)
    if per_image > vmem_limit:
        raise ValueError("single-image working set exceeds the VMEM budget; "
                         "strip-mine H inside the kernel for images this large")
    block_b = _pick_block_b(B, per_image, vmem_limit)
    grid = (B // block_b,)

    kernel = functools.partial(_spa_refl_kernel, weight=float(loss_weight), k1d=k1d)

    out = pl.pallas_call(
        kernel,
        out_shape=jax.ShapeDtypeStruct((B, Ho, Wo), jnp.float32),
        grid_spec=pltpu.PrefetchScalarGridSpec(
            num_scalar_prefetch=0,
            grid=grid,
            in_specs=[
                pl.BlockSpec((block_b, H, W), lambda n: (n, 0, 0)),
                pl.BlockSpec((block_b, H, W), lambda n: (n, 0, 0)),
            ],
            out_specs=pl.BlockSpec((block_b, Ho, Wo), lambda n: (n, 0, 0)),
        ),
        compiler_params=pltpu.CompilerParams(
            dimension_semantics=("parallel",),
            vmem_limit_bytes=vmem_limit,
        ),
    )(xb, yb)
    return out.reshape(N, C, Ho, Wo)


# ------------------------- pure-JAX reference (check) ------------------------
def _ref_l_spa_refl(enhance, org, loss_weight=1.0, spa_kernel=5):
    N, C, H, W = org.shape
    K = int(spa_kernel)
    g2 = jnp.asarray(_gauss_2d(K, K / 4.0))

    def dwconv(x, k2d):
        kh, kw = k2d.shape
        w = jnp.broadcast_to(k2d, (C, 1, kh, kw))
        return jax.lax.conv_general_dilated(
            x, w, (1, 1), "VALID",
            dimension_numbers=("NCHW", "OIHW", "NCHW"),
            feature_group_count=C)

    kl = jnp.asarray(np.array([[0, 0, 0], [-1, 1, 0], [0, 0, 0]], np.float32))
    kr = jnp.asarray(np.array([[0, 0, 0], [0, 1, -1], [0, 0, 0]], np.float32))
    ku = jnp.asarray(np.array([[0, -1, 0], [0, 1, 0], [0, 0, 0]], np.float32))
    kd = jnp.asarray(np.array([[0, 0, 0], [0, 1, 0], [0, -1, 0]], np.float32))

    op = dwconv(org.astype(jnp.float32), g2)
    ep = dwconv(enhance.astype(jnp.float32), g2)

    D_l = dwconv(op, kl) - dwconv(ep, kl)
    D_r = dwconv(op, kr) - dwconv(ep, kr)
    D_u = dwconv(op, ku) - dwconv(ep, ku)
    D_d = dwconv(op, kd) - dwconv(ep, kd)
    E = D_l ** 2 + D_r ** 2 + D_u ** 2 + D_d ** 2
    return loss_weight * E


if __name__ == "__main__":
    key = jax.random.PRNGKey(0)
    k1, k2 = jax.random.split(key)

    # L_spaRefl uses groups=3 -> C must be 3.
    N, C, H, W = 2, 3, 16, 16
    spa_kernel = 5
    loss_weight = 0.5

    enhance = jax.random.uniform(k1, (N, C, H, W), dtype=jnp.float32)
    org = jax.random.uniform(k2, (N, C, H, W), dtype=jnp.float32)

    # f32 path
    out = jax.block_until_ready(
        l_spa_refl(enhance, org, loss_weight=loss_weight, spa_kernel=spa_kernel))
    ref = jax.block_until_ready(
        _ref_l_spa_refl(enhance, org, loss_weight=loss_weight, spa_kernel=spa_kernel))
    assert out.shape == ref.shape, (out.shape, ref.shape)
    assert np.allclose(np.asarray(out), np.asarray(ref), rtol=1e-4, atol=1e-6), (
        float(np.max(np.abs(np.asarray(out) - np.asarray(ref)))))

    # Native-dtype (bf16) DMA path: inputs stay bf16 on the wire, widened in-VMEM.
    enh_bf = enhance.astype(jnp.bfloat16)
    org_bf = org.astype(jnp.bfloat16)
    out_bf = jax.block_until_ready(
        l_spa_refl(enh_bf, org_bf, loss_weight=loss_weight, spa_kernel=spa_kernel))
    ref_bf = jax.block_until_ready(
        _ref_l_spa_refl(enh_bf, org_bf, loss_weight=loss_weight, spa_kernel=spa_kernel))
    assert np.allclose(np.asarray(out_bf), np.asarray(ref_bf), rtol=1e-3, atol=1e-5), (
        float(np.max(np.abs(np.asarray(out_bf) - np.asarray(ref_bf)))))

    print("KERNEL_OK")
</pallas_src>

<mosaic_0001>
module attributes {stable_mosaic.version = 11 : i64} {
  func.func @_spa_refl_kernel(%arg0: i32, %arg1: memref<3x16x16xf32, #tpu.memory_space<vmem>>, %arg2: memref<3x16x16xf32, #tpu.memory_space<vmem>>, %arg3: memref<3x10x10xf32, #tpu.memory_space<vmem>>) attributes {dimension_semantics = [#tpu.dimension_semantics<parallel>], iteration_bounds = array<i64: 2>, scalar_prefetch = 0 : i64, scratch_operands = 0 : i64, tpu.core_type = #tpu.core_type<tc>, window_params = [{transform_indices = @transform_0, window_bounds = array<i64: 3, 16, 16>}, {transform_indices = @transform_1, window_bounds = array<i64: 3, 16, 16>}, {transform_indices = @transform_2, window_bounds = array<i64: 3, 10, 10>}]} {
    %c0 = arith.constant 0 : index
    %c0_0 = arith.constant 0 : index
    %c0_1 = arith.constant 0 : index
    %0 = vector.load %arg1[%c0, %c0_0, %c0_1] : memref<3x16x16xf32, #tpu.memory_space<vmem>>, vector<3x16x16xf32>
    %c0_2 = arith.constant 0 : index
    %c0_3 = arith.constant 0 : index
    %c0_4 = arith.constant 0 : index
    %1 = vector.load %arg2[%c0_2, %c0_3, %c0_4] : memref<3x16x16xf32, #tpu.memory_space<vmem>>, vector<3x16x16xf32>
    %2 = arith.subf %1, %0 : vector<3x16x16xf32>
    %3 = vector.extract_strided_slice %2 {offsets = [0, 0, 0], sizes = [3, 12, 16], strides = [1, 1, 1]} : vector<3x16x16xf32> to vector<3x12x16xf32>
    %cst = arith.constant 0.0924211591 : f32
    %4 = vector.broadcast %cst : f32 to vector<3x12x16xf32>
    %5 = arith.mulf %4, %3 : vector<3x12x16xf32>
    %6 = vector.extract_strided_slice %2 {offsets = [0, 1, 0], sizes = [3, 12, 16], strides = [1, 1, 1]} : vector<3x16x16xf32> to vector<3x12x16xf32>
    %cst_5 = arith.constant 0.241376027 : f32
    %7 = vector.broadcast %cst_5 : f32 to vector<3x12x16xf32>
    %8 = arith.mulf %7, %6 : vector<3x12x16xf32>
    %9 = arith.addf %5, %8 : vector<3x12x16xf32>
    %10 = vector.extract_strided_slice %2 {offsets = [0, 2, 0], sizes = [3, 12, 16], strides = [1, 1, 1]} : vector<3x16x16xf32> to vector<3x12x16xf32>
    %cst_6 = arith.constant 0.332405627 : f32
    %11 = vector.broadcast %cst_6 : f32 to vector<3x12x16xf32>
    %12 = arith.mulf %11, %10 : vector<3x12x16xf32>
    %13 = arith.addf %9, %12 : vector<3x12x16xf32>
    %14 = vector.extract_strided_slice %2 {offsets = [0, 3, 0], sizes = [3, 12, 16], strides = [1, 1, 1]} : vector<3x16x16xf32> to vector<3x12x16xf32>
    %cst_7 = arith.constant 0.241376027 : f32
    %15 = vector.broadcast %cst_7 : f32 to vector<3x12x16xf32>
    %16 = arith.mulf %15, %14 : vector<3x12x16xf32>
    %17 = arith.addf %13, %16 : vector<3x12x16xf32>
    %18 = vector.extract_strided_slice %2 {offsets = [0, 4, 0], sizes = [3, 12, 16], strides = [1, 1, 1]} : vector<3x16x16xf32> to vector<3x12x16xf32>
    %cst_8 = arith.constant 0.0924211591 : f32
    %19 = vector.broadcast %cst_8 : f32 to vector<3x12x16xf32>
    %20 = arith.mulf %19, %18 : vector<3x12x16xf32>
    %21 = arith.addf %17, %20 : vector<3x12x16xf32>
    %22 = vector.extract_strided_slice %21 {offsets = [0, 0, 0], sizes = [3, 12, 12], strides = [1, 1, 1]} : vector<3x12x16xf32> to vector<3x12x12xf32>
    %cst_9 = arith.constant 0.0924211591 : f32
    %23 = vector.broadcast %cst_9 : f32 to vector<3x12x12xf32>
    %24 = arith.mulf %23, %22 : vector<3x12x12xf32>
    %25 = vector.extract_strided_slice %21 {offsets = [0, 0, 1], sizes = [3, 12, 12], strides = [1, 1, 1]} : vector<3x12x16xf32> to vector<3x12x12xf32>
    %cst_10 = arith.constant 0.241376027 : f32
    %26 = vector.broadcast %cst_10 : f32 to vector<3x12x12xf32>
    %27 = arith.mulf %26, %25 : vector<3x12x12xf32>
    %28 = arith.addf %24, %27 : vector<3x12x12xf32>
    %29 = vector.extract_strided_slice %21 {offsets = [0, 0, 2], sizes = [3, 12, 12], strides = [1, 1, 1]} : vector<3x12x16xf32> to vector<3x12x12xf32>
    %cst_11 = arith.constant 0.332405627 : f32
    %30 = vector.broadcast %cst_11 : f32 to vector<3x12x12xf32>
    %31 = arith.mulf %30, %29 : vector<3x12x12xf32>
    %32 = arith.addf %28, %31 : vector<3x12x12xf32>
    %33 = vector.extract_strided_slice %21 {offsets = [0, 0, 3], sizes = [3, 12, 12], strides = [1, 1, 1]} : vector<3x12x16xf32> to vector<3x12x12xf32>
    %cst_12 = arith.constant 0.241376027 : f32
    %34 = vector.broadcast %cst_12 : f32 to vector<3x12x12xf32>
    %35 = arith.mulf %34, %33 : vector<3x12x12xf32>
    %36 = arith.addf %32, %35 : vector<3x12x12xf32>
    %37 = vector.extract_strided_slice %21 {offsets = [0, 0, 4], sizes = [3, 12, 12], strides = [1, 1, 1]} : vector<3x12x16xf32> to vector<3x12x12xf32>
    %cst_13 = arith.constant 0.0924211591 : f32
    %38 = vector.broadcast %cst_13 : f32 to vector<3x12x12xf32>
    %39 = arith.mulf %38, %37 : vector<3x12x12xf32>
    %40 = arith.addf %36, %39 : vector<3x12x12xf32>
    %41 = vector.extract_strided_slice %40 {offsets = [0, 1, 1], sizes = [3, 10, 11], strides = [1, 1, 1]} : vector<3x12x12xf32> to vector<3x10x11xf32>
    %42 = vector.extract_strided_slice %40 {offsets = [0, 1, 0], sizes = [3, 10, 11], strides = [1, 1, 1]} : vector<3x12x12xf32> to vector<3x10x11xf32>
    %43 = arith.subf %41, %42 : vector<3x10x11xf32>
    %44 = vector.extract_strided_slice %40 {offsets = [0, 1, 1], sizes = [3, 11, 10], strides = [1, 1, 1]} : vector<3x12x12xf32> to vector<3x11x10xf32>
    %45 = vector.extract_strided_slice %40 {offsets = [0, 0, 1], sizes = [3, 11, 10], strides = [1, 1, 1]} : vector<3x12x12xf32> to vector<3x11x10xf32>
    %46 = arith.subf %44, %45 : vector<3x11x10xf32>
    %47 = arith.mulf %43, %43 : vector<3x10x11xf32>
    %48 = arith.mulf %46, %46 : vector<3x11x10xf32>
    %49 = vector.extract_strided_slice %47 {offsets = [0, 0, 0], sizes = [3, 10, 10], strides = [1, 1, 1]} : vector<3x10x11xf32> to vector<3x10x10xf32>
    %50 = vector.extract_strided_slice %47 {offsets = [0, 0, 1], sizes = [3, 10, 10], strides = [1, 1, 1]} : vector<3x10x11xf32> to vector<3x10x10xf32>
    %51 = arith.addf %49, %50 : vector<3x10x10xf32>
    %52 = vector.extract_strided_slice %48 {offsets = [0, 0, 0], sizes = [3, 10, 10], strides = [1, 1, 1]} : vector<3x11x10xf32> to vector<3x10x10xf32>
    %53 = arith.addf %51, %52 : vector<3x10x10xf32>
    %54 = vector.extract_strided_slice %48 {offsets = [0, 1, 0], sizes = [3, 10, 10], strides = [1, 1, 1]} : vector<3x11x10xf32> to vector<3x10x10xf32>
    %55 = arith.addf %53, %54 : vector<3x10x10xf32>
    %cst_14 = arith.constant 5.000000e-01 : f32
    %56 = vector.broadcast %cst_14 : f32 to vector<3x10x10xf32>
    %57 = arith.mulf %56, %55 : vector<3x10x10xf32>
    %c0_15 = arith.constant 0 : index
    %c0_16 = arith.constant 0 : index
    %c0_17 = arith.constant 0 : index
    %58 = vector.load %arg3[%c0_15, %c0_16, %c0_17] : memref<3x10x10xf32, #tpu.memory_space<vmem>>, vector<3x10x10xf32>
    tpu.vector_store %arg3[%c0_15, %c0_16, %c0_17], %57 {strides = array<i32>} : memref<3x10x10xf32, #tpu.memory_space<vmem>>, vector<3x10x10xf32>,
    return
  }
  func.func @transform_0(%arg0: i32) -> (i32, i32, i32) {
    %c0_i32 = arith.constant 0 : i32
    %c0_i32_0 = arith.constant 0 : i32
    %c0_i32_1 = arith.constant 0 : i32
    return %arg0, %c0_i32, %c0_i32_0 : i32, i32, i32
  }
  func.func @transform_1(%arg0: i32) -> (i32, i32, i32) {
    %c0_i32 = arith.constant 0 : i32
    %c0_i32_0 = arith.constant 0 : i32
    %c0_i32_1 = arith.constant 0 : i32
    return %arg0, %c0_i32, %c0_i32_0 : i32, i32, i32
  }
  func.func @transform_2(%arg0: i32) -> (i32, i32, i32) {
    %c0_i32 = arith.constant 0 : i32
    %c0_i32_0 = arith.constant 0 : i32
    %c0_i32_1 = arith.constant 0 : i32
    return %arg0, %c0_i32, %c0_i32_0 : i32, i32, i32
  }
}

</mosaic_0001>

<llo_original>
// kernel: tpu_custom_call.1
$region0: #{tpu_custom_call.1}
  #allocation0 [shape = 'u32[]', space=smem, size = 0x4, offset = 0x4, fixed_abs, tag = 'smem constant byte address 0x4 - core index']
  #allocation1 [shape = 'u32[72,128]{1,0:T(1,128)}', space=vmem, size = 0x9000, scoped, tag = 'internal scratch']
  %s0 = inlined_call_operand.hbm [shape: f32[6,16,16], index: 0, kind: input, shape index: {}]
  %s1 = inlined_call_operand.hbm [shape: f32[6,16,16], index: 1, kind: input, shape index: {}]
  %s2 = inlined_call_operand.vmem [shape: f32[6,10,10], index: 2, kind: output, shape index: {}]
  %s3 = sld [smem:[#allocation0]]
  $region49: #{tpu_custom_call.1} parent=0
    _
  %s5 = ssub.s32 1, %s3
  %s6 = scalar_select 0, %s5, %s3
  $region1: #{tpu_custom_call.1} parent=0
    #allocation2 [shape = 'u8[49152]{0}', space=vmem, size = 0xc000, scoped, tag = 'input window, operand 0']
    #allocation3 [shape = 's32[2]{0}', space=sflag, size = 0x8, scoped, tag = 'scoped memory for tpu_custom_call.1']
    #allocation4 [shape = 'u8[49152]{0}', space=vmem, size = 0xc000, scoped, tag = 'input window, operand 1']
    #allocation5 [shape = 's32[2]{0}', space=sflag, size = 0x8, scoped, tag = 'scoped memory for tpu_custom_call.1']
    %7 = vsyncpa [#allocation3], 0
    %s8 = scalar_lea.sflag [#allocation3], 1
    %9 = vsyncpa %s8, 0
    %10 = vsyncpa [#allocation5], 0
    %s11 = scalar_lea.sflag [#allocation5], 1
    %12 = vsyncpa %s11, 0
    loop: start=0, step=1, limit=4
    $region2: #{tpu_custom_call.1} parent=1 // loop_pre_header
      _
    $region3: #{tpu_custom_call.1} parent=1 // loop_header
      %s14 = sphi 0, %s18
      %p15 = scmp.ge.s32.totalorder %s14, 4
      %s24 = sphi 0, %s26
      %s27 = sphi 0, %s24
      %s28 = sphi 0, %s27
      %s44 = sphi 0, %s28
      %s50 = sphi 0, %s52
      %s53 = sphi 0, %s50
      %s54 = sphi 0, %s53
      %s70 = sphi 0, %s54
      %s76 = sphi 0, %s78
      %s79 = sphi 0, %s76
      %s80 = sphi 0, %s79
      %s96 = sphi 0, %s80
    $region4: #{tpu_custom_call.1} parent=1 // loop_header_branch
      %17 = sbr.rel (%p15) target = $region8
    $region5: #{tpu_custom_call.1} parent=1 // loop_body
      %s19 = ssub.s32 %s14, 1
      %s20 = ssub.s32 %s14, 2
      %s21 = sadd.s32 %s14, 1
      %s22 = ssub.s32 %s14, %s21
      %p23 = scmp.eq.s32.totalorder %s22, 0
      %s25 = sadd.s32 %s24, 1
      %s26 = scalar_select %p23, %s24, %s25
      %p29 = pneg %p23
      %p30 = scmp.eq.s32.totalorder %s14, 1
      %p31 = por %p29, %p30
      %p32 = scmp.ne.s32.totalorder %s24, %s27
      %p33 = scmp.eq.s32.totalorder %s14, 0
      %p34 = por %p32, %p33
      %p35 = scmp.ne.s32.totalorder %s24, %s27
      %p36 = scmp.eq.s32.totalorder %s19, 1
      %p37 = por %p35, %p36
      %p38 = scmp.ne.s32.totalorder %s27, %s28
      %p39 = scmp.eq.s32.totalorder %s19, 0
      %p40 = por %p38, %p39
      %p41 = scmp.ne.s32.totalorder %s27, %s28
      %p42 = scmp.eq.s32.totalorder %s20, 1
      %p43 = por %p41, %p42
      %p45 = scmp.ne.s32.totalorder %s28, %s44
      %p46 = scmp.eq.s32.totalorder %s20, 0
      %p47 = por %p45, %p46
      %s48 = ssub.s32 %s14, %s21
      %p49 = scmp.eq.s32.totalorder %s48, 0
      %s51 = sadd.s32 %s50, 1
      %s52 = scalar_select %p49, %s50, %s51
      %p55 = pneg %p49
      %p56 = scmp.eq.s32.totalorder %s14, 1
      %p57 = por %p55, %p56
      %p58 = scmp.ne.s32.totalorder %s50, %s53
      %p59 = scmp.eq.s32.totalorder %s14, 0
      %p60 = por %p58, %p59
      %p61 = scmp.ne.s32.totalorder %s50, %s53
      %p62 = scmp.eq.s32.totalorder %s19, 1
      %p63 = por %p61, %p62
      %p64 = scmp.ne.s32.totalorder %s53, %s54
      %p65 = scmp.eq.s32.totalorder %s19, 0
      %p66 = por %p64, %p65
      %p67 = scmp.ne.s32.totalorder %s53, %s54
      %p68 = scmp.eq.s32.totalorder %s20, 1
      %p69 = por %p67, %p68
      %p71 = scmp.ne.s32.totalorder %s54, %s70
      %p72 = scmp.eq.s32.totalorder %s20, 0
      %p73 = por %p71, %p72
      %s74 = ssub.s32 %s14, %s21
      %p75 = scmp.eq.s32.totalorder %s74, 0
      %s77 = sadd.s32 %s76, 1
      %s78 = scalar_select %p75, %s76, %s77
      %p81 = pneg %p75
      %p82 = scmp.eq.s32.totalorder %s14, 1
      %p83 = por %p81, %p82
      %p84 = scmp.ne.s32.totalorder %s76, %s79
      %p85 = scmp.eq.s32.totalorder %s14, 0
      %p86 = por %p84, %p85
      %p87 = scmp.ne.s32.totalorder %s76, %s79
      %p88 = scmp.eq.s32.totalorder %s19, 1
      %p89 = por %p87, %p88
      %p90 = scmp.ne.s32.totalorder %s79, %s80
      %p91 = scmp.eq.s32.totalorder %s19, 0
      %p92 = por %p90, %p91
      %p93 = scmp.ne.s32.totalorder %s79, %s80
      %p94 = scmp.eq.s32.totalorder %s20, 1
      %p95 = por %p93, %p94
      %p97 = scmp.ne.s32.totalorder %s80, %s96
      %p98 = scmp.eq.s32.totalorder %s20, 0
      %p99 = por %p97, %p98
      %p100 = scmp.le.s32.totalorder 1, %s14
      %p101 = scmp.lt.s32.totalorder %s14, 3
      %p102 = pnand %p100, %p101
      %p103 = pneg %p102
      // Predicated region
      $region9: #{tpu_custom_call.1} parent=5 // pred_check
        _
      $region10: #{tpu_custom_call.1} parent=5 // pred_check_branch
        %105 = sbr.rel (%p102) target = $region12
      $region11: #{tpu_custom_call.1} parent=5 // pred_region
        %s106 = ssub.s32 %s14, 1
      $region12: #{tpu_custom_call.1} parent=5 // pred_fallthru
        _
      %p107 = scmp.lt.s32.totalorder %s14, 2
      // Predicated region
      $region13: #{tpu_custom_call.1} parent=5 // pred_check
        %p108 = pneg %p107
      $region14: #{tpu_custom_call.1} parent=5 // pred_check_branch
        %110 = sbr.rel (%p108) target = $region16
      $region15: #{tpu_custom_call.1} parent=5 // pred_region
        // Predicated region
        $region17: #{tpu_custom_call.1} parent=15 // pred_check
          %p111 = pneg %p34
        $region18: #{tpu_custom_call.1} parent=15 // pred_check_branch
          %113 = sbr.rel (%p111) target = $region20
        $region19: #{tpu_custom_call.1} parent=15 // pred_region
          %s114 = sand.u32 %s24, 1
          %s115 = scalar_lea.sflag [#allocation3], %s114
          %s116 = sand.u32 %s24, 1
          %s117 = smul.addr %s116, 48
          %s118 = scalar_lea.vmem [#allocation2], %s117
          %s119 = smul.u32 3, %s14
          %121 = vsyncadd %s115, 0
          %s122 = smul.addr %s119, 2
          %s123 = smul.addr %s122, 8
          %s124 = scalar_lea.hbm %s0, %s123
          %s125 = sshll.u32 %s124, 4
          %s126 = int_to_ptr.hbm [resolvable:$true] %s125
          %s127 = sshll.u32 %s118, 4
          %s128 = int_to_ptr.vmem [resolvable:$true] %s127
          %133 = dma.hbm_to_vmem [thread:$0]  %s126, 768, %s128, %s115, 128, 128, 8
        $region20: #{tpu_custom_call.1} parent=15 // pred_fallthru
          _
        // Predicated region
        $region21: #{tpu_custom_call.1} parent=15 // pred_check
          %p134 = pneg %p60
        $region22: #{tpu_custom_call.1} parent=15 // pred_check_branch
          %136 = sbr.rel (%p134) target = $region24
        $region23: #{tpu_custom_call.1} parent=15 // pred_region
          %s137 = sand.u32 %s50, 1
          %s138 = scalar_lea.sflag [#allocation5], %s137
          %s139 = sand.u32 %s50, 1
          %s140 = smul.addr %s139, 48
          %s141 = scalar_lea.vmem [#allocation4], %s140
          %s142 = smul.u32 3, %s14
          %144 = vsyncadd %s138, 0
          %s145 = smul.addr %s142, 2
          %s146 = smul.addr %s145, 8
          %s147 = scalar_lea.hbm %s1, %s146
          %s148 = sshll.u32 %s147, 4
          %s149 = int_to_ptr.hbm [resolvable:$true] %s148
          %s150 = sshll.u32 %s141, 4
          %s151 = int_to_ptr.vmem [resolvable:$true] %s150
          %156 = dma.hbm_to_vmem [thread:$0]  %s149, 768, %s151, %s138, 128, 128, 8
        $region24: #{tpu_custom_call.1} parent=15 // pred_fallthru
          _
      $region16: #{tpu_custom_call.1} parent=5 // pred_fallthru
        _
      %p157 = scmp.le.s32.totalorder 1, %s14
      %p158 = scmp.lt.s32.totalorder %s14, 3
      %p159 = pnand %p157, %p158
      %p160 = pneg %p159
      // Predicated region
      $region25: #{tpu_custom_call.1} parent=5 // pred_check
        _
      $region26: #{tpu_custom_call.1} parent=5 // pred_check_branch
        %162 = sbr.rel (%p159) target = $region28
      $region27: #{tpu_custom_call.1} parent=5 // pred_region
        %s163 = ssub.s32 %s14, 1
        %s164 = sand.u32 %s27, 1
        %s165 = scalar_lea.sflag [#allocation3], %s164
        %s166 = sand.u32 %s27, 1
        %s167 = smul.addr %s166, 48
        %s168 = scalar_lea.vmem [#allocation2], %s167
        // Predicated region
        $region29: #{tpu_custom_call.1} parent=27 // pred_check
          %p169 = pneg %p40
        $region30: #{tpu_custom_call.1} parent=27 // pred_check_branch
          %171 = sbr.rel (%p169) target = $region32
        $region31: #{tpu_custom_call.1} parent=27 // pred_region
          %173 = dma.done %s165, 768
        $region32: #{tpu_custom_call.1} parent=27 // pred_fallthru
          _
        %s174 = sand.u32 %s53, 1
        %s175 = scalar_lea.sflag [#allocation5], %s174
        %s176 = sand.u32 %s53, 1
        %s177 = smul.addr %s176, 48
        %s178 = scalar_lea.vmem [#allocation4], %s177
        // Predicated region
        $region33: #{tpu_custom_call.1} parent=27 // pred_check
          %p179 = pneg %p66
        $region34: #{tpu_custom_call.1} parent=27 // pred_check_branch
          %181 = sbr.rel (%p179) target = $region36
        $region35: #{tpu_custom_call.1} parent=27 // pred_region
          %183 = dma.done %s175, 768
        $region36: #{tpu_custom_call.1} parent=27 // pred_fallthru
          _
        %s184 = sand.u32 %s27, 1
        %s185 = scalar_lea.sflag [#allocation3], %s184
        %s186 = sand.u32 %s27, 1
        %s187 = smul.addr %s186, 48
        %s188 = scalar_lea.vmem [#allocation2], %s187
        %p189 = pneg %p40
        %p190 = pneg %p37
        %s191 = sand.u32 %s53, 1
        %s192 = scalar_lea.sflag [#allocation5], %s191
        %s193 = sand.u32 %s53, 1
        %s194 = smul.addr %s193, 48
        %s195 = scalar_lea.vmem [#allocation4], %s194
        %p196 = pneg %p66
        %p197 = pneg %p63
        %p198 = pneg %p92
        %p199 = pneg %p89
        %s200 = smul.u32 3, %s19
        %p201 = scmp.lt.s32.totalorder %s200, 5
        %s202 = scalar_select %p201, %s200, 5
        %s203 = smul.addr %s202, 2
        %s204 = smul.addr %s203, 8
        %s205 = scalar_lea.vmem %s2, %s204
        %s206 = smul.u32 3, %s19
        %s207 = smul.u32 3, %s19
        %s208 = smul.u32 3, %s19
        %p209 = scmp.lt.s32.totalorder %s208, 5
        %s210 = scalar_select %p209, %s208, 5
        %s211 = smul.addr %s210, 2
        %s212 = smul.addr %s211, 8
        %s213 = scalar_lea.vmem %s2, %s212
        %s214 = smul.u32 3, %s19
        %v215 = vld [vmem:[%s168] sm:$0xff]
        %v216 = vld [vmem:[%s168 + $0x8] sm:$0xff]
        %v217 = vld [vmem:[%s168 + $0x10] sm:$0xff]
        %v218 = vld [vmem:[%s168 + $0x18] sm:$0xff]
        %v219 = vld [vmem:[%s168 + $0x20] sm:$0xff]
        %v220 = vld [vmem:[%s168 + $0x28] sm:$0xff]
        %v221 = vld [vmem:[%s178] sm:$0xff]
        %v222 = vld [vmem:[%s178 + $0x8] sm:$0xff]
        %v223 = vld [vmem:[%s178 + $0x10] sm:$0xff]
        %v224 = vld [vmem:[%s178 + $0x18] sm:$0xff]
        %v225 = vld [vmem:[%s178 + $0x20] sm:$0xff]
        %v226 = vld [vmem:[%s178 + $0x28] sm:$0xff]
        %v227 = vsub.f32 %v221, %v215
        %v228 = vsub.f32 %v222, %v216
        %v229 = vsub.f32 %v223, %v217
        %v230 = vsub.f32 %v224, %v218
        %v231 = vsub.f32 %v225, %v219
        %v232 = vsub.f32 %v226, %v220
        %v233 = vmul.f32 %v227, 0.09242116
        %v234 = vmul.f32 %v228, 0.09242116
        %v235 = vmul.f32 %v229, 0.09242116
        %v236 = vmul.f32 %v230, 0.09242116
        %v237 = vmul.f32 %v231, 0.09242116
        %v238 = vmul.f32 %v232, 0.09242116
        %v239 = vmul.f32 %v227, 0.24137603
        %v240 = vmul.f32 %v228, 0.24137603
        %v241 = vmul.f32 %v229, 0.24137603
        %v242 = vmul.f32 %v230, 0.24137603
        %v243 = vmul.f32 %v231, 0.24137603
        %v244 = vmul.f32 %v232, 0.24137603
        %vm251 = vcmask 1046528
        %v252 = vrot.slane %v239, 1
        %v253 = vrot.slane %v240, 1
        %v254 = vsel %vm251, %v252, %v253
        %v255 = vrot.slane %v241, 1
        %v256 = vrot.slane %v242, 1
        %v257 = vsel %vm251, %v255, %v256
        %v258 = vrot.slane %v243, 1
        %v259 = vrot.slane %v244, 1
        %v260 = vsel %vm251, %v258, %v259
        %v267 = vadd.f32 %v233, %v254
        %v268 = vadd.f32 %v234, %v253
        %v269 = vadd.f32 %v235, %v257
        %v270 = vadd.f32 %v236, %v256
        %v271 = vadd.f32 %v237, %v260
        %v272 = vadd.f32 %v238, %v259
        %v273 = vmul.f32 %v227, 0.33240563
        %v274 = vmul.f32 %v228, 0.33240563
        %v275 = vmul.f32 %v229, 0.33240563
        %v276 = vmul.f32 %v230, 0.33240563
        %v277 = vmul.f32 %v231, 0.33240563
        %v278 = vmul.f32 %v232, 0.33240563
        %vm285 = vcmask 1045504
        %v286 = vrot.slane %v273, 2
        %v287 = vrot.slane %v274, 2
        %v288 = vsel %vm285, %v286, %v287
        %v289 = vrot.slane %v275, 2
        %v290 = vrot.slane %v276, 2
        %v291 = vsel %vm285, %v289, %v290
        %v292 = vrot.slane %v277, 2
        %v293 = vrot.slane %v278, 2
        %v294 = vsel %vm285, %v292, %v293
        %v301 = vadd.f32 %v267, %v288
        %v302 = vadd.f32 %v268, %v287
        %v303 = vadd.f32 %v269, %v291
        %v304 = vadd.f32 %v270, %v290
        %v305 = vadd.f32 %v271, %v294
        %v306 = vadd.f32 %v272, %v293
        %vm307 = vcmask 1044480
        %v308 = vrot.slane %v239, 3
        %v309 = vrot.slane %v240, 3
        %v310 = vsel %vm307, %v308, %v309
        %v311 = vrot.slane %v241, 3
        %v312 = vrot.slane %v242, 3
        %v313 = vsel %vm307, %v311, %v312
        %v314 = vrot.slane %v243, 3
        %v315 = vrot.slane %v244, 3
        %v316 = vsel %vm307, %v314, %v315
        %v323 = vadd.f32 %v301, %v310
        %v324 = vadd.f32 %v302, %v309
        %v325 = vadd.f32 %v303, %v313
        %v326 = vadd.f32 %v304, %v312
        %v327 = vadd.f32 %v305, %v316
        %v328 = vadd.f32 %v306, %v315
        %vm335 = vcmask 1043456
        %v336 = vrot.slane %v233, 4
        %v337 = vrot.slane %v234, 4
        %v338 = vsel %vm335, %v336, %v337
        %v339 = vrot.slane %v235, 4
        %v340 = vrot.slane %v236, 4
        %v341 = vsel %vm335, %v339, %v340
        %v342 = vrot.slane %v237, 4
        %v343 = vrot.slane %v238, 4
        %v344 = vsel %vm335, %v342, %v343
        %v351 = vadd.f32 %v323, %v338
        %v352 = vadd.f32 %v324, %v337
        %v353 = vadd.f32 %v325, %v341
        %v354 = vadd.f32 %v326, %v340
        %v355 = vadd.f32 %v327, %v344
        %v356 = vadd.f32 %v328, %v343
        %v357 = vmul.f32 %v351, 0.09242116
        %v358 = vmul.f32 %v352, 0.09242116
        %v359 = vmul.f32 %v353, 0.09242116
        %v360 = vmul.f32 %v354, 0.09242116
        %v361 = vmul.f32 %v355, 0.09242116
        %v362 = vmul.f32 %v356, 0.09242116
        %v363 = vmul.f32 %v351, 0.24137603
        %v364 = vmul.f32 %v352, 0.24137603
        %v365 = vmul.f32 %v353, 0.24137603
        %v366 = vmul.f32 %v354, 0.24137603
        %v367 = vmul.f32 %v355, 0.24137603
        %v368 = vmul.f32 %v356, 0.24137603
        %375 = vrot.lane.b32.xlu0 %v363, 127
        %v376 = vpop.permute.xlu0 %375
        %377 = vrot.lane.b32.xlu0 %v364, 127
        %v378 = vpop.permute.xlu0 %377
        %379 = vrot.lane.b32.xlu0 %v365, 127
        %v380 = vpop.permute.xlu0 %379
        %381 = vrot.lane.b32.xlu0 %v366, 127
        %v382 = vpop.permute.xlu0 %381
        %383 = vrot.lane.b32.xlu0 %v367, 127
        %v384 = vpop.permute.xlu0 %383
        %385 = vrot.lane.b32.xlu0 %v368, 127
        %v386 = vpop.permute.xlu0 %385
        %v393 = vadd.f32 %v357, %v376
        %v394 = vadd.f32 %v358, %v378
        %v395 = vadd.f32 %v359, %v380
        %v396 = vadd.f32 %v360, %v382
        %v397 = vadd.f32 %v361, %v384
        %v398 = vadd.f32 %v362, %v386
        %v399 = vmul.f32 %v351, 0.33240563
        %v400 = vmul.f32 %v352, 0.33240563
        %v401 = vmul.f32 %v353, 0.33240563
        %v402 = vmul.f32 %v354, 0.33240563
        %v403 = vmul.f32 %v355, 0.33240563
        %v404 = vmul.f32 %v356, 0.33240563
        %411 = vrot.lane.b32.xlu0 %v399, 126
        %v412 = vpop.permute.xlu0 %411
        %413 = vrot.lane.b32.xlu0 %v400, 126
        %v414 = vpop.permute.xlu0 %413
        %415 = vrot.lane.b32.xlu0 %v401, 126
        %v416 = vpop.permute.xlu0 %415
        %417 = vrot.lane.b32.xlu0 %v402, 126
        %v418 = vpop.permute.xlu0 %417
        %419 = vrot.lane.b32.xlu0 %v403, 126
        %v420 = vpop.permute.xlu0 %419
        %421 = vrot.lane.b32.xlu0 %v404, 126
        %v422 = vpop.permute.xlu0 %421
        %v429 = vadd.f32 %v393, %v412
        %v430 = vadd.f32 %v394, %v414
        %v431 = vadd.f32 %v395, %v416
        %v432 = vadd.f32 %v396, %v418
        %v433 = vadd.f32 %v397, %v420
        %v434 = vadd.f32 %v398, %v422
        %435 = vrot.lane.b32.xlu0 %v363, 125
        %v436 = vpop.permute.xlu0 %435
        %437 = vrot.lane.b32.xlu0 %v364, 125
        %v438 = vpop.permute.xlu0 %437
        %439 = vrot.lane.b32.xlu0 %v365, 125
        %v440 = vpop.permute.xlu0 %439
        %441 = vrot.lane.b32.xlu0 %v366, 125
        %v442 = vpop.permute.xlu0 %441
        %443 = vrot.lane.b32.xlu0 %v367, 125
        %v444 = vpop.permute.xlu0 %443
        %445 = vrot.lane.b32.xlu0 %v368, 125
        %v446 = vpop.permute.xlu0 %445
        %v453 = vadd.f32 %v429, %v436
        %v454 = vadd.f32 %v430, %v438
        %v455 = vadd.f32 %v431, %v440
        %v456 = vadd.f32 %v432, %v442
        %v457 = vadd.f32 %v433, %v444
        %v458 = vadd.f32 %v434, %v446
        %465 = vrot.lane.b32.xlu0 %v357, 124
        %v466 = vpop.permute.xlu0 %465
        %467 = vrot.lane.b32.xlu0 %v358, 124
        %v468 = vpop.permute.xlu0 %467
        %469 = vrot.lane.b32.xlu0 %v359, 124
        %v470 = vpop.permute.xlu0 %469
        %471 = vrot.lane.b32.xlu0 %v360, 124
        %v472 = vpop.permute.xlu0 %471
        %473 = vrot.lane.b32.xlu0 %v361, 124
        %v474 = vpop.permute.xlu0 %473
        %475 = vrot.lane.b32.xlu0 %v362, 124
        %v476 = vpop.permute.xlu0 %475
        %v483 = vadd.f32 %v453, %v466
        %v484 = vadd.f32 %v454, %v468
        %v485 = vadd.f32 %v455, %v470
        %v486 = vadd.f32 %v456, %v472
        %v487 = vadd.f32 %v457, %v474
        %v488 = vadd.f32 %v458, %v476
        %495 = vrot.lane.b32.xlu0 %v483, 1
        %v496 = vpop.permute.xlu0 %495
        %497 = vrot.lane.b32.xlu0 %v484, 1
        %v498 = vpop.permute.xlu0 %497
        %499 = vrot.lane.b32.xlu0 %v485, 1
        %v500 = vpop.permute.xlu0 %499
        %501 = vrot.lane.b32.xlu0 %v486, 1
        %v502 = vpop.permute.xlu0 %501
        %503 = vrot.lane.b32.xlu0 %v487, 1
        %v504 = vpop.permute.xlu0 %503
        %505 = vrot.lane.b32.xlu0 %v488, 1
        %v506 = vpop.permute.xlu0 %505
        %v513 = vsub.f32 %v483, %v496
        %v514 = vsub.f32 %v484, %v498
        %v515 = vsub.f32 %v485, %v500
        %v516 = vsub.f32 %v486, %v502
        %v517 = vsub.f32 %v487, %v504
        %v518 = vsub.f32 %v488, %v506
        %vm519 = vcmask 1040384
        %v520 = vrot.slane %v483, 7
        %v521 = vrot.slane %v484, 7
        %v522 = vsel %vm519, %v520, %v521
        %v523 = vrot.slane %v485, 7
        %v524 = vrot.slane %v486, 7
        %v525 = vsel %vm519, %v523, %v524
        %v526 = vrot.slane %v487, 7
        %v527 = vrot.slane %v488, 7
        %v528 = vsel %vm519, %v526, %v527
        %v535 = vsub.f32 %v483, %v520
        %v536 = vsub.f32 %v484, %v522
        %v537 = vsub.f32 %v485, %v523
        %v538 = vsub.f32 %v486, %v525
        %v539 = vsub.f32 %v487, %v526
        %v540 = vsub.f32 %v488, %v528
        %v541 = vmul.f32 %v513, %v513
        %v542 = vmul.f32 %v514, %v514
        %v543 = vmul.f32 %v515, %v515
        %v544 = vmul.f32 %v516, %v516
        %v545 = vmul.f32 %v517, %v517
        %v546 = vmul.f32 %v518, %v518
        %v547 = vmul.f32 %v535, %v535
        %v548 = vmul.f32 %v536, %v536
        %v549 = vmul.f32 %v537, %v537
        %v550 = vmul.f32 %v538, %v538
        %v551 = vmul.f32 %v539, %v539
        %v552 = vmul.f32 %v540, %v540
        %559 = vrot.lane.b32.xlu0 %v541, 127
        %v560 = vpop.permute.xlu0 %559
        %561 = vrot.lane.b32.xlu0 %v542, 127
        %v562 = vpop.permute.xlu0 %561
        %563 = vrot.lane.b32.xlu0 %v543, 127
        %v564 = vpop.permute.xlu0 %563
        %565 = vrot.lane.b32.xlu0 %v544, 127
        %v566 = vpop.permute.xlu0 %565
        %567 = vrot.lane.b32.xlu0 %v545, 127
        %v568 = vpop.permute.xlu0 %567
        %569 = vrot.lane.b32.xlu0 %v546, 127
        %v570 = vpop.permute.xlu0 %569
        %v577 = vadd.f32 %v541, %v560
        %v578 = vadd.f32 %v542, %v562
        %v579 = vadd.f32 %v543, %v564
        %v580 = vadd.f32 %v544, %v566
        %v581 = vadd.f32 %v545, %v568
        %v582 = vadd.f32 %v546, %v570
        %v583 = vadd.f32 %v577, %v547
        %v584 = vadd.f32 %v578, %v548
        %v585 = vadd.f32 %v579, %v549
        %v586 = vadd.f32 %v580, %v550
        %v587 = vadd.f32 %v581, %v551
        %v588 = vadd.f32 %v582, %v552
        %v595 = vrot.slane %v547, 1
        %v596 = vrot.slane %v548, 1
        %v597 = vsel %vm251, %v595, %v596
        %v598 = vrot.slane %v549, 1
        %v599 = vrot.slane %v550, 1
        %v600 = vsel %vm251, %v598, %v599
        %v601 = vrot.slane %v551, 1
        %v602 = vrot.slane %v552, 1
        %v603 = vsel %vm251, %v601, %v602
        %v610 = vadd.f32 %v583, %v597
        %v611 = vadd.f32 %v584, %v596
        %v612 = vadd.f32 %v585, %v600
        %v613 = vadd.f32 %v586, %v599
        %v614 = vadd.f32 %v587, %v603
        %v615 = vadd.f32 %v588, %v602
        %v616 = vmul.f32 %v610, 0.5
        %v617 = vmul.f32 %v611, 0.5
        %v618 = vmul.f32 %v612, 0.5
        %v619 = vmul.f32 %v613, 0.5
        %v620 = vmul.f32 %v614, 0.5
        %v621 = vmul.f32 %v615, 0.5
        %628 = vrot.lane.b32.xlu0 %v616, 127
        %v629 = vpop.permute.xlu0 %628
        %630 = vrot.lane.b32.xlu0 %v617, 127
        %v631 = vpop.permute.xlu0 %630
        %632 = vrot.lane.b32.xlu0 %v618, 127
        %v633 = vpop.permute.xlu0 %632
        %634 = vrot.lane.b32.xlu0 %v619, 127
        %v635 = vpop.permute.xlu0 %634
        %636 = vrot.lane.b32.xlu0 %v620, 127
        %v637 = vpop.permute.xlu0 %636
        %638 = vrot.lane.b32.xlu0 %v621, 127
        %v639 = vpop.permute.xlu0 %638
        %vm646 = vcmask 80897
        %647 = vst.msk [vmem:[%s213 - $0x1] sm:$0xfe] %vm646, %v629
        %vm648 = vcmask 75776
        %649 = vst.msk [vmem:[%s213 + $0x7] sm:$0x7] %vm648, %v631
        %650 = vst.msk [vmem:[%s213 + $0xf] sm:$0xfe] %vm646, %v633
        %651 = vst.msk [vmem:[%s213 + $0x17] sm:$0x7] %vm648, %v635
        %652 = vst.msk [vmem:[%s213 + $0x1f] sm:$0xfe] %vm646, %v637
        %653 = vst.msk [vmem:[%s213 + $0x27] sm:$0x7] %vm648, %v639
        %s654 = smul.u32 3, %s19
        %p655 = scmp.lt.s32.totalorder %s654, 5
        %s656 = scalar_select %p655, %s654, 5
        %s657 = smul.addr %s656, 2
        %s658 = smul.addr %s657, 8
        %s659 = scalar_lea.vmem %s2, %s658
        // Predicated region
        $region37: #{tpu_custom_call.1} parent=27 // pred_check
          %p660 = pneg %p89
        $region38: #{tpu_custom_call.1} parent=27 // pred_check_branch
          %662 = sbr.rel (%p660) target = $region40
        $region39: #{tpu_custom_call.1} parent=27 // pred_region
          %s663 = smul.u32 3, %s19
        $region40: #{tpu_custom_call.1} parent=27 // pred_fallthru
          _
      $region28: #{tpu_custom_call.1} parent=5 // pred_fallthru
        _
      %p664 = scmp.le.s32.totalorder 2, %s14
      // Predicated region
      $region41: #{tpu_custom_call.1} parent=5 // pred_check
        %p665 = pneg %p664
      $region42: #{tpu_custom_call.1} parent=5 // pred_check_branch
        %667 = sbr.rel (%p665) target = $region44
      $region43: #{tpu_custom_call.1} parent=5 // pred_region
        %s668 = ssub.s32 %s14, 2
        // Predicated region
        $region45: #{tpu_custom_call.1} parent=43 // pred_check
          %p669 = pneg %p95
        $region46: #{tpu_custom_call.1} parent=43 // pred_check_branch
          %671 = sbr.rel (%p669) target = $region48
        $region47: #{tpu_custom_call.1} parent=43 // pred_region
          %s672 = smul.u32 3, %s20
          %p673 = scmp.lt.s32.totalorder %s672, 5
          %s674 = scalar_select %p673, %s672, 5
          %s675 = smul.addr %s674, 2
          %s676 = smul.addr %s675, 8
          %s677 = scalar_lea.vmem %s2, %s676
        $region48: #{tpu_custom_call.1} parent=43 // pred_fallthru
          _
      $region44: #{tpu_custom_call.1} parent=5 // pred_fallthru
        _
    $region6: #{tpu_custom_call.1} parent=1 // loop_footer
      %s18 = sadd.s32 1, %s14
    $region7: #{tpu_custom_call.1} parent=1 // loop_footer_branch
      %13 = sbr.rel target = $region3
    $region8: #{tpu_custom_call.1} parent=1 // loop_exit
      _
    %678 = vsyncpa [#allocation3], 1
    %s679 = scalar_lea.sflag [#allocation3], 1
    %680 = vsyncpa %s679, 1
    %681 = vsyncpa [#allocation5], 1
    %s682 = scalar_lea.sflag [#allocation5], 1
    %683 = vsyncpa %s682, 1

</llo_original>
